<compile_context>
chip_gen: v6e
topology: v6e:2x2x1
jax: 0.10.0
libtpu: 0.0.40
codegen_flags: <defaults>
</compile_context>

<pallas_src>
import functools

import jax
import jax.numpy as jnp
from jax.experimental import pallas as pl
from jax.experimental.pallas import tpu as pltpu

_LANE = 128                            # vreg lane width
_SUB = 8                               # f32 sublane height: one (8,128) accumulator vreg
_CHUNK_ROWS = 256                      # in-kernel compute chunk: (256,128) f32 temps ~0.5 MiB
_BLOCK_BYTES = 4 * 1024 * 1024         # per-input, per-buffer DMA block
_VMEM_LIMIT_BYTES = 32 * 1024 * 1024   # 2 inputs x 2 buffers x 4 MiB + chunk temps (< 32 MiB)
_PALLAS_MIN_BYTES = 2 * 1024 * 1024    # below this a single fused XLA reduction wins


def _num_tensorcores() -> int:
    """TensorCores per device: 2 on megacore (v4/v5p) and v7x-class, 1 on v5e/v6e."""
    try:
        kind = jax.devices()[0].device_kind.lower()
    except Exception:
        return 1
    if "lite" in kind or "v5e" in kind or "v6" in kind:
        return 1
    if "v4" in kind or "v5" in kind or "v7" in kind:
        return 2
    return 1


def _mse_partial_kernel(x_ref, t_ref, psum_ref, *, chunk_rows, n_chunks):
    """Adds sum((x - t)^2) of one (block_rows, 128) block into the per-split
    (1, 8, 128) output block, which stays resident across the reduction axis."""
    j = pl.program_id(1)

    @pl.when(j == 0)
    def _init():
        psum_ref[...] = jnp.zeros_like(psum_ref)

    def chunk_body(c, acc):
        r0 = pl.multiple_of(c * chunk_rows, chunk_rows)
        xc = x_ref[pl.ds(r0, chunk_rows), :].astype(jnp.float32)
        tc = t_ref[pl.ds(r0, chunk_rows), :].astype(jnp.float32)
        d = xc - tc
        # Fold the chunk's rows onto the (8,128) running sum: tiling-preserving
        # reshape + elementwise VPU adds; no cross-lane XLU reduce in the loop.
        return acc + jnp.sum((d * d).reshape(-1, _SUB, _LANE), axis=0)

    acc = jax.lax.fori_loop(0, n_chunks, chunk_body,
                            jnp.zeros((_SUB, _LANE), jnp.float32))
    psum_ref[...] += acc[jnp.newaxis]


def _plan_blocks(rows, itemsize, num_splits):
    """Pick (num_splits, blocks_per_split, block_rows) with block_rows a multiple
    of the chunk size and total coverage <= rows (no out-of-bounds windows)."""
    max_block_rows = max(
        _CHUNK_ROWS, (_BLOCK_BYTES // (_LANE * itemsize)) // _CHUNK_ROWS * _CHUNK_ROWS)
    total_chunks = rows // _CHUNK_ROWS            # >= 1 (guaranteed by caller)
    num_splits = max(1, min(num_splits, total_chunks))
    chunks_per_block = min(max_block_rows // _CHUNK_ROWS,
                           max(1, total_chunks // num_splits))
    block_rows = chunks_per_block * _CHUNK_ROWS
    blocks_per_split = max(1, (rows // block_rows) // num_splits)
    return num_splits, blocks_per_split, block_rows


def content_loss_forward(x, target, *, force_pallas=False, num_splits=None):
    """Returns (x, loss) matching ContentLoss.forward: output is x (identity),
    loss is mean((x - target)^2) over all elements."""
    assert x.shape == target.shape, "x and target must have identical shapes"
    n = x.size
    if n == 0:
        return x, jnp.array(jnp.nan, jnp.float32)

    xf = x.reshape(-1)          # free (layout-preserving) flatten, not a copy
    tf = target.reshape(-1)

    rows = n // _LANE
    itemsize = max(jnp.dtype(x.dtype).itemsize, jnp.dtype(target.dtype).itemsize)
    big_enough = n * itemsize >= _PALLAS_MIN_BYTES
    # Pallas path needs a free (rows, 128) view -> lane-aligned element count.
    can_pallas = (n % _LANE == 0) and rows >= _CHUNK_ROWS

    if not can_pallas or not (big_enough or force_pallas):
        # Tiny / non-lane-aligned tensors: a single fused XLA reduction is
        # already HBM-bound optimal and avoids any padding copy or launch cost.
        d = xf.astype(jnp.float32) - tf.astype(jnp.float32)
        return x, jnp.sum(d * d) / n

    if num_splits is None:
        num_splits = _num_tensorcores()
    num_splits, blocks_per_split, block_rows = _plan_blocks(rows, itemsize, num_splits)
    rows_main = num_splits * blocks_per_split * block_rows   # block-aligned prefix (<= rows)

    x2 = xf.reshape(rows, _LANE)      # free view, no pad, no slice copy
    t2 = tf.reshape(rows, _LANE)

    kernel = functools.partial(_mse_partial_kernel,
                               chunk_rows=_CHUNK_ROWS,
                               n_chunks=block_rows // _CHUNK_ROWS)
    in_idx = lambda i, j: (i * blocks_per_split + j, 0)

    partials = pl.pallas_call(
        kernel,
        out_shape=jax.ShapeDtypeStruct((num_splits, _SUB, _LANE), jnp.float32),
        grid_spec=pltpu.PrefetchScalarGridSpec(
            num_scalar_prefetch=0,
            grid=(num_splits, blocks_per_split),
            in_specs=[
                pl.BlockSpec((block_rows, _LANE), in_idx),
                pl.BlockSpec((block_rows, _LANE), in_idx),
            ],
            out_specs=pl.BlockSpec((1, _SUB, _LANE), lambda i, j: (i, 0, 0)),
        ),
        compiler_params=pltpu.CompilerParams(
            dimension_semantics=("parallel", "arbitrary"),
            vmem_limit_bytes=_VMEM_LIMIT_BYTES,
        ),
    )(x2, t2)

    total = jnp.sum(partials)

    # Rows past the block-aligned prefix (and any lane tail) fold in via a tiny
    # fused XLA reduction; the slice fuses, so no extra HBM copy materializes.
    if rows_main * _LANE < n:
        dt = (xf[rows_main * _LANE:].astype(jnp.float32)
              - tf[rows_main * _LANE:].astype(jnp.float32))
        total = total + jnp.sum(dt * dt)

    # TODO(synk): the stateful `self.loss` attribute has no kernel equivalent;
    # the loss is returned alongside the identity pass-through instead.
    return x, total / n


if __name__ == "__main__":
    key = jax.random.PRNGKey(0)
    ks = jax.random.split(key, 8)

    def ref_loss(a, b):
        return jnp.mean((a.astype(jnp.float32) - b.astype(jnp.float32)) ** 2)

    cases = []

    # 1) Module-faithful small conv feature map -> XLA fast path (identity + loss).
    x0 = jax.random.normal(ks[0], (2, 4, 16, 16), jnp.float32)
    t0 = jax.random.normal(ks[1], (2, 4, 16, 16), jnp.float32)
    cases.append((x0, t0, content_loss_forward(x0, t0)))

    # 2) Pallas kernel, single block (2*8*32*64 = 32768 elems = 256 lane rows).
    x1 = jax.random.normal(ks[2], (2, 8, 32, 64), jnp.float32)
    t1 = jax.random.normal(ks[3], (2, 8, 32, 64), jnp.float32)
    cases.append((x1, t1, content_loss_forward(x1, t1, force_pallas=True)))

    # 3) Pallas kernel + fused-XLA tail (300 lane rows -> 256-row block + 44-row tail).
    x2 = jax.random.normal(ks[4], (2, 5, 60, 64), jnp.float32)
    t2 = jax.random.normal(ks[5], (2, 5, 60, 64), jnp.float32)
    cases.append((x2, t2, content_loss_forward(x2, t2, force_pallas=True)))

    # 4) Two-split "parallel" grid + bf16 inputs (4*8*64*64 = 1024 lane rows).
    x3 = jax.random.normal(ks[6], (4, 8, 64, 64), jnp.bfloat16)
    t3 = jax.random.normal(ks[7], (4, 8, 64, 64), jnp.bfloat16)
    cases.append((x3, t3, content_loss_forward(x3, t3, force_pallas=True, num_splits=2)))

    for xi, ti, (yi, li) in cases:
        yi = jax.block_until_ready(yi)
        li = jax.block_until_ready(li)
        ri = jax.block_until_ready(ref_loss(xi, ti))
        assert jnp.array_equal(yi, xi), "forward() must return x unchanged"
        assert jnp.allclose(li, ri, rtol=1e-4, atol=1e-6), (float(li), float(ri))

    print("KERNEL_OK")
</pallas_src>

<mosaic_0001>
module attributes {stable_mosaic.version = 11 : i64} {
  func.func @_mse_partial_kernel(%arg0: i32, %arg1: i32, %arg2: memref<256x128xf32, #tpu.memory_space<vmem>>, %arg3: memref<256x128xf32, #tpu.memory_space<vmem>>, %arg4: memref<1x8x128xf32, #tpu.memory_space<vmem>>) attributes {dimension_semantics = [#tpu.dimension_semantics<parallel>, #tpu.dimension_semantics<arbitrary>], iteration_bounds = array<i64: 1, 1>, scalar_prefetch = 0 : i64, scratch_operands = 0 : i64, tpu.core_type = #tpu.core_type<tc>, window_params = [{transform_indices = @transform_0, window_bounds = array<i64: 256, 128>}, {transform_indices = @transform_1, window_bounds = array<i64: 256, 128>}, {transform_indices = @transform_2, window_bounds = array<i64: 1, 8, 128>}]} {
    %c0_i32 = arith.constant 0 : i32
    %0 = arith.cmpi eq, %arg1, %c0_i32 : i32
    %1 = arith.extui %0 : i1 to i32
    %c0_i32_0 = arith.constant 0 : i32
    %2 = arith.cmpi ne, %1, %c0_i32_0 : i32
    scf.if %2 {
      %cst_10 = arith.constant 0.000000e+00 : f32
      %19 = vector.broadcast %cst_10 : f32 to vector<1x8x128xf32>
      %c0_11 = arith.constant 0 : index
      %c0_12 = arith.constant 0 : index
      %c0_13 = arith.constant 0 : index
      %20 = vector.load %arg4[%c0_11, %c0_12, %c0_13] : memref<1x8x128xf32, #tpu.memory_space<vmem>>, vector<1x8x128xf32>
      tpu.vector_store %arg4[%c0_11, %c0_12, %c0_13], %19 {strides = array<i32>} : memref<1x8x128xf32, #tpu.memory_space<vmem>>, vector<1x8x128xf32>,
    } else {
    }
    %cst = arith.constant 0.000000e+00 : f32
    %3 = vector.broadcast %cst : f32 to vector<8x128xf32>
    %c0_i32_1 = arith.constant 0 : i32
    %c256_i32 = arith.constant 256 : i32
    %4 = arith.muli %c0_i32_1, %c256_i32 : i32
    %5 = tpu.assume_multiple %4, 256 : i32
    %6 = arith.index_cast %5 : i32 to index
    %c0 = arith.constant 0 : index
    %7 = vector.load %arg2[%6, %c0] : memref<256x128xf32, #tpu.memory_space<vmem>>, vector<256x128xf32>
    %8 = arith.index_cast %5 : i32 to index
    %c0_2 = arith.constant 0 : index
    %9 = vector.load %arg3[%8, %c0_2] : memref<256x128xf32, #tpu.memory_space<vmem>>, vector<256x128xf32>
    %10 = arith.subf %7, %9 : vector<256x128xf32>
    %11 = arith.mulf %10, %10 : vector<256x128xf32>
    %12 = vector.shape_cast %11 : vector<256x128xf32> to vector<32x8x128xf32>
    %cst_3 = arith.constant dense<0.000000e+00> : vector<8x128xf32>
    %13 = vector.multi_reduction <add>, %12, %cst_3 [0] : vector<32x8x128xf32> to vector<8x128xf32>
    %14 = arith.addf %3, %13 : vector<8x128xf32>
    %c1_i32 = arith.constant 1 : i32
    %c0_4 = arith.constant 0 : index
    %c0_5 = arith.constant 0 : index
    %c0_6 = arith.constant 0 : index
    %15 = vector.load %arg4[%c0_4, %c0_5, %c0_6] : memref<1x8x128xf32, #tpu.memory_space<vmem>>, vector<1x8x128xf32>
    %16 = vector.shape_cast %14 : vector<8x128xf32> to vector<1x8x128xf32>
    %17 = arith.addf %15, %16 : vector<1x8x128xf32>
    %c0_7 = arith.constant 0 : index
    %c0_8 = arith.constant 0 : index
    %c0_9 = arith.constant 0 : index
    %18 = vector.load %arg4[%c0_7, %c0_8, %c0_9] : memref<1x8x128xf32, #tpu.memory_space<vmem>>, vector<1x8x128xf32>
    tpu.vector_store %arg4[%c0_7, %c0_8, %c0_9], %17 {strides = array<i32>} : memref<1x8x128xf32, #tpu.memory_space<vmem>>, vector<1x8x128xf32>,
    return
  }
  func.func @transform_0(%arg0: i32, %arg1: i32) -> (i32, i32) {
    %c1_i32 = arith.constant 1 : i32
    %0 = arith.muli %arg0, %c1_i32 : i32
    %1 = arith.addi %0, %arg1 : i32
    %c0_i32 = arith.constant 0 : i32
    %c0_i32_0 = arith.constant 0 : i32
    return %1, %c0_i32 : i32, i32
  }
  func.func @transform_1(%arg0: i32, %arg1: i32) -> (i32, i32) {
    %c1_i32 = arith.constant 1 : i32
    %0 = arith.muli %arg0, %c1_i32 : i32
    %1 = arith.addi %0, %arg1 : i32
    %c0_i32 = arith.constant 0 : i32
    %c0_i32_0 = arith.constant 0 : i32
    return %1, %c0_i32 : i32, i32
  }
  func.func @transform_2(%arg0: i32, %arg1: i32) -> (i32, i32, i32) {
    %c0_i32 = arith.constant 0 : i32
    %c0_i32_0 = arith.constant 0 : i32
    %c0_i32_1 = arith.constant 0 : i32
    return %arg0, %c0_i32, %c0_i32_0 : i32, i32, i32
  }
}

</mosaic_0001>

<llo_original>
// kernel: tpu_custom_call.1
$region0: #{tpu_custom_call.1}
  #allocation0 [shape = 'u32[]', space=smem, size = 0x4, offset = 0x4, fixed_abs, tag = 'smem constant byte address 0x4 - core index']
  #allocation1 [shape = 'u32[144,128]{1,0:T(1,128)}', space=vmem, size = 0x12000, scoped, tag = 'internal scratch']
  %s0 = inlined_call_operand.hbm [shape: f32[256,128], index: 0, kind: input, shape index: {}]
  %s1 = inlined_call_operand.hbm [shape: f32[256,128], index: 1, kind: input, shape index: {}]
  %s2 = inlined_call_operand.hbm [shape: f32[1,8,128], index: 2, kind: output, shape index: {}]
  %s3 = sld [smem:[#allocation0]]
  $region30: #{tpu_custom_call.1} parent=0
    _
  %s5 = ssub.s32 1, %s3
  %s6 = scalar_select 0, %s5, %s3
  $region1: #{tpu_custom_call.1} parent=0
    #allocation2 [shape = 'u8[131072]{0}', space=vmem, size = 0x20000, scoped, tag = 'input window, operand 0, single buffered']
    #allocation3 [shape = 's32[1]{0}', space=sflag, size = 0x4, scoped, tag = 'scoped memory for tpu_custom_call.1']
    #allocation4 [shape = 's32[1]{0}', space=sflag, size = 0x4, scoped, tag = 'scoped memory for tpu_custom_call.1']
    #allocation5 [shape = 'u8[131072]{0}', space=vmem, size = 0x20000, scoped, tag = 'input window, operand 1, single buffered']
    #allocation6 [shape = 's32[1]{0}', space=sflag, size = 0x4, scoped, tag = 'scoped memory for tpu_custom_call.1']
    #allocation7 [shape = 'u8[4096]{0}', space=vmem, size = 0x1000, scoped, tag = 'output window, operand 0, single buffered']
    %7 = vsyncpa [#allocation3], 0
    %8 = vsyncpa [#allocation6], 0
    %9 = vsyncpa [#allocation4], 0
    // Predicated region
    $region2: #{tpu_custom_call.1} parent=1 // pred_check
      _
    $region3: #{tpu_custom_call.1} parent=1 // pred_check_branch
      %11 = sbr.rel (0) target = $region5
    $region4: #{tpu_custom_call.1} parent=1 // pred_region
      %s12 = sadd.s32 0, 0
      %s13 = smul.u32 32, %s12
      %s15 = ssub.s32 4096, 4096
      %16 = vsyncadd [#allocation3], %s15
      %s17 = smul.addr %s13, 128
      %s18 = scalar_lea.hbm %s0, %s17
      %s19 = sshll.u32 [#allocation2], 4
      %s20 = int_to_ptr.vmem [resolvable:$true] %s19
      %25 = dma.hbm_to_vmem [thread:$0]  %s18, 4096, %s20, [#allocation3], 128, 128, 8
    $region5: #{tpu_custom_call.1} parent=1 // pred_fallthru
      _
    // Predicated region
    $region6: #{tpu_custom_call.1} parent=1 // pred_check
      _
    $region7: #{tpu_custom_call.1} parent=1 // pred_check_branch
      %27 = sbr.rel (0) target = $region9
    $region8: #{tpu_custom_call.1} parent=1 // pred_region
      %s28 = sadd.s32 0, 0
      %s29 = smul.u32 32, %s28
      %s31 = ssub.s32 4096, 4096
      %32 = vsyncadd [#allocation6], %s31
      %s33 = smul.addr %s29, 128
      %s34 = scalar_lea.hbm %s1, %s33
      %s35 = sshll.u32 [#allocation5], 4
      %s36 = int_to_ptr.vmem [resolvable:$true] %s35
      %41 = dma.hbm_to_vmem [thread:$0]  %s34, 4096, %s36, [#allocation6], 128, 128, 8
    $region9: #{tpu_custom_call.1} parent=1 // pred_fallthru
      _
    // Predicated region
    $region10: #{tpu_custom_call.1} parent=1 // pred_check
      _
    $region11: #{tpu_custom_call.1} parent=1 // pred_check_branch
      %43 = sbr.rel (0) target = $region13
    $region12: #{tpu_custom_call.1} parent=1 // pred_region
      %44 = dma.done [#allocation3], 4096
    $region13: #{tpu_custom_call.1} parent=1 // pred_fallthru
      _
    // Predicated region
    $region14: #{tpu_custom_call.1} parent=1 // pred_check
      _
    $region15: #{tpu_custom_call.1} parent=1 // pred_check_branch
      %46 = sbr.rel (0) target = $region17
    $region16: #{tpu_custom_call.1} parent=1 // pred_region
      %47 = dma.done [#allocation6], 4096
    $region17: #{tpu_custom_call.1} parent=1 // pred_fallthru
      _
    %s48 = sadd.s32 0, 0
    %s49 = smul.u32 32, %s48
    %s50 = sadd.s32 0, 0
    %s51 = smul.u32 32, %s50
    %p52 = scmp.eq.s32.totalorder 0, 0
    // Predicated region
    $region18: #{tpu_custom_call.1} parent=1 // pred_check
      %p53 = pneg %p52
    $region19: #{tpu_custom_call.1} parent=1 // pred_check_branch
      %55 = sbr.rel (%p53) target = $region21
    $region20: #{tpu_custom_call.1} parent=1 // pred_region
      %56 = vst [vmem:[#allocation7] sm:$0xff] 0.0
    $region21: #{tpu_custom_call.1} parent=1 // pred_fallthru
      _
    %v57 = vld [vmem:[#allocation2] sm:$0xff]
    %v58 = vld [vmem:[#allocation2 + $0x8] sm:$0xff]
    %v59 = vld [vmem:[#allocation2 + $0x10] sm:$0xff]
    %v60 = vld [vmem:[#allocation2 + $0x18] sm:$0xff]
    %v61 = vld [vmem:[#allocation2 + $0x20] sm:$0xff]
    %v62 = vld [vmem:[#allocation2 + $0x28] sm:$0xff]
    %v63 = vld [vmem:[#allocation2 + $0x30] sm:$0xff]
    %v64 = vld [vmem:[#allocation2 + $0x38] sm:$0xff]
    %v65 = vld [vmem:[#allocation2 + $0x40] sm:$0xff]
    %v66 = vld [vmem:[#allocation2 + $0x48] sm:$0xff]
    %v67 = vld [vmem:[#allocation2 + $0x50] sm:$0xff]
    %v68 = vld [vmem:[#allocation2 + $0x58] sm:$0xff]
    %v69 = vld [vmem:[#allocation2 + $0x60] sm:$0xff]
    %v70 = vld [vmem:[#allocation2 + $0x68] sm:$0xff]
    %v71 = vld [vmem:[#allocation2 + $0x70] sm:$0xff]
    %v72 = vld [vmem:[#allocation2 + $0x78] sm:$0xff]
    %v73 = vld [vmem:[#allocation2 + $0x80] sm:$0xff]
    %v74 = vld [vmem:[#allocation2 + $0x88] sm:$0xff]
    %v75 = vld [vmem:[#allocation2 + $0x90] sm:$0xff]
    %v76 = vld [vmem:[#allocation2 + $0x98] sm:$0xff]
    %v77 = vld [vmem:[#allocation2 + $0xa0] sm:$0xff]
    %v78 = vld [vmem:[#allocation2 + $0xa8] sm:$0xff]
    %v79 = vld [vmem:[#allocation2 + $0xb0] sm:$0xff]
    %v80 = vld [vmem:[#allocation2 + $0xb8] sm:$0xff]
    %v81 = vld [vmem:[#allocation2 + $0xc0] sm:$0xff]
    %v82 = vld [vmem:[#allocation2 + $0xc8] sm:$0xff]
    %v83 = vld [vmem:[#allocation2 + $0xd0] sm:$0xff]
    %v84 = vld [vmem:[#allocation2 + $0xd8] sm:$0xff]
    %v85 = vld [vmem:[#allocation2 + $0xe0] sm:$0xff]
    %v86 = vld [vmem:[#allocation2 + $0xe8] sm:$0xff]
    %v87 = vld [vmem:[#allocation2 + $0xf0] sm:$0xff]
    %v88 = vld [vmem:[#allocation2 + $0xf8] sm:$0xff]
    %v89 = vld [vmem:[#allocation5] sm:$0xff]
    %v90 = vld [vmem:[#allocation5 + $0x8] sm:$0xff]
    %v91 = vld [vmem:[#allocation5 + $0x10] sm:$0xff]
    %v92 = vld [vmem:[#allocation5 + $0x18] sm:$0xff]
    %v93 = vld [vmem:[#allocation5 + $0x20] sm:$0xff]
    %v94 = vld [vmem:[#allocation5 + $0x28] sm:$0xff]
    %v95 = vld [vmem:[#allocation5 + $0x30] sm:$0xff]
    %v96 = vld [vmem:[#allocation5 + $0x38] sm:$0xff]
    %v97 = vld [vmem:[#allocation5 + $0x40] sm:$0xff]
    %v98 = vld [vmem:[#allocation5 + $0x48] sm:$0xff]
    %v99 = vld [vmem:[#allocation5 + $0x50] sm:$0xff]
    %v100 = vld [vmem:[#allocation5 + $0x58] sm:$0xff]
    %v101 = vld [vmem:[#allocation5 + $0x60] sm:$0xff]
    %v102 = vld [vmem:[#allocation5 + $0x68] sm:$0xff]
    %v103 = vld [vmem:[#allocation5 + $0x70] sm:$0xff]
    %v104 = vld [vmem:[#allocation5 + $0x78] sm:$0xff]
    %v105 = vld [vmem:[#allocation5 + $0x80] sm:$0xff]
    %v106 = vld [vmem:[#allocation5 + $0x88] sm:$0xff]
    %v107 = vld [vmem:[#allocation5 + $0x90] sm:$0xff]
    %v108 = vld [vmem:[#allocation5 + $0x98] sm:$0xff]
    %v109 = vld [vmem:[#allocation5 + $0xa0] sm:$0xff]
    %v110 = vld [vmem:[#allocation5 + $0xa8] sm:$0xff]
    %v111 = vld [vmem:[#allocation5 + $0xb0] sm:$0xff]
    %v112 = vld [vmem:[#allocation5 + $0xb8] sm:$0xff]
    %v113 = vld [vmem:[#allocation5 + $0xc0] sm:$0xff]
    %v114 = vld [vmem:[#allocation5 + $0xc8] sm:$0xff]
    %v115 = vld [vmem:[#allocation5 + $0xd0] sm:$0xff]
    %v116 = vld [vmem:[#allocation5 + $0xd8] sm:$0xff]
    %v117 = vld [vmem:[#allocation5 + $0xe0] sm:$0xff]
    %v118 = vld [vmem:[#allocation5 + $0xe8] sm:$0xff]
    %v119 = vld [vmem:[#allocation5 + $0xf0] sm:$0xff]
    %v120 = vld [vmem:[#allocation5 + $0xf8] sm:$0xff]
    %v121 = vsub.f32 %v57, %v89
    %v122 = vsub.f32 %v58, %v90
    %v123 = vsub.f32 %v59, %v91
    %v124 = vsub.f32 %v60, %v92
    %v125 = vsub.f32 %v61, %v93
    %v126 = vsub.f32 %v62, %v94
    %v127 = vsub.f32 %v63, %v95
    %v128 = vsub.f32 %v64, %v96
    %v129 = vsub.f32 %v65, %v97
    %v130 = vsub.f32 %v66, %v98
    %v131 = vsub.f32 %v67, %v99
    %v132 = vsub.f32 %v68, %v100
    %v133 = vsub.f32 %v69, %v101
    %v134 = vsub.f32 %v70, %v102
    %v135 = vsub.f32 %v71, %v103
    %v136 = vsub.f32 %v72, %v104
    %v137 = vsub.f32 %v73, %v105
    %v138 = vsub.f32 %v74, %v106
    %v139 = vsub.f32 %v75, %v107
    %v140 = vsub.f32 %v76, %v108
    %v141 = vsub.f32 %v77, %v109
    %v142 = vsub.f32 %v78, %v110
    %v143 = vsub.f32 %v79, %v111
    %v144 = vsub.f32 %v80, %v112
    %v145 = vsub.f32 %v81, %v113
    %v146 = vsub.f32 %v82, %v114
    %v147 = vsub.f32 %v83, %v115
    %v148 = vsub.f32 %v84, %v116
    %v149 = vsub.f32 %v85, %v117
    %v150 = vsub.f32 %v86, %v118
    %v151 = vsub.f32 %v87, %v119
    %v152 = vsub.f32 %v88, %v120
    %v153 = vmul.f32 %v121, %v121
    %v154 = vmul.f32 %v122, %v122
    %v155 = vmul.f32 %v123, %v123
    %v156 = vmul.f32 %v124, %v124
    %v157 = vmul.f32 %v125, %v125
    %v158 = vmul.f32 %v126, %v126
    %v159 = vmul.f32 %v127, %v127
    %v160 = vmul.f32 %v128, %v128
    %v161 = vmul.f32 %v129, %v129
    %v162 = vmul.f32 %v130, %v130
    %v163 = vmul.f32 %v131, %v131
    %v164 = vmul.f32 %v132, %v132
    %v165 = vmul.f32 %v133, %v133
    %v166 = vmul.f32 %v134, %v134
    %v167 = vmul.f32 %v135, %v135
    %v168 = vmul.f32 %v136, %v136
    %v169 = vmul.f32 %v137, %v137
    %v170 = vmul.f32 %v138, %v138
    %v171 = vmul.f32 %v139, %v139
    %v172 = vmul.f32 %v140, %v140
    %v173 = vmul.f32 %v141, %v141
    %v174 = vmul.f32 %v142, %v142
    %v175 = vmul.f32 %v143, %v143
    %v176 = vmul.f32 %v144, %v144
    %v177 = vmul.f32 %v145, %v145
    %v178 = vmul.f32 %v146, %v146
    %v179 = vmul.f32 %v147, %v147
    %v180 = vmul.f32 %v148, %v148
    %v181 = vmul.f32 %v149, %v149
    %v182 = vmul.f32 %v150, %v150
    %v183 = vmul.f32 %v151, %v151
    %v184 = vmul.f32 %v152, %v152
    %v185 = vadd.f32 %v153, %v154
    %v186 = vadd.f32 %v185, %v155
    %v187 = vadd.f32 %v186, %v156
    %v188 = vadd.f32 %v187, %v157
    %v189 = vadd.f32 %v188, %v158
    %v190 = vadd.f32 %v189, %v159
    %v191 = vadd.f32 %v190, %v160
    %v192 = vadd.f32 %v191, %v161
    %v193 = vadd.f32 %v192, %v162
    %v194 = vadd.f32 %v193, %v163
    %v195 = vadd.f32 %v194, %v164
    %v196 = vadd.f32 %v195, %v165
    %v197 = vadd.f32 %v196, %v166
    %v198 = vadd.f32 %v197, %v167
    %v199 = vadd.f32 %v198, %v168
    %v200 = vadd.f32 %v199, %v169
    %v201 = vadd.f32 %v200, %v170
    %v202 = vadd.f32 %v201, %v171
    %v203 = vadd.f32 %v202, %v172
    %v204 = vadd.f32 %v203, %v173
    %v205 = vadd.f32 %v204, %v174
    %v206 = vadd.f32 %v205, %v175
    %v207 = vadd.f32 %v206, %v176
    %v208 = vadd.f32 %v207, %v177
    %v209 = vadd.f32 %v208, %v178
    %v210 = vadd.f32 %v209, %v179
    %v211 = vadd.f32 %v210, %v180
    %v212 = vadd.f32 %v211, %v181
    %v213 = vadd.f32 %v212, %v182
    %v214 = vadd.f32 %v213, %v183
    %v215 = vadd.f32 %v214, %v184
    %v216 = vadd.f32 %v215, 0.0
    %v217 = vld [vmem:[#allocation7] sm:$0xff]
    %v218 = vadd.f32 %v217, %v216
    %219 = vst [vmem:[#allocation7] sm:$0xff] %v218
    // Predicated region
    $region22: #{tpu_custom_call.1} parent=1 // pred_check
      _
    $region23: #{tpu_custom_call.1} parent=1 // pred_check_branch
      %221 = sbr.rel (0) target = $region25
    $region24: #{tpu_custom_call.1} parent=1 // pred_region
      %s223 = ssub.s32 128, 128
      %224 = vsyncadd [#allocation4], %s223
      %s226 = sshll.u32 [#allocation7], 4
      %s227 = int_to_ptr.vmem [resolvable:$true] %s226
      %229 = dma.vmem_to_hbm [thread:$0]  %s227, 128, %s2, [#allocation4]
    $region25: #{tpu_custom_call.1} parent=1 // pred_fallthru
      _
    // Predicated region
    $region26: #{tpu_custom_call.1} parent=1 // pred_check
      _
    $region27: #{tpu_custom_call.1} parent=1 // pred_check_branch
      %231 = sbr.rel (0) target = $region29
    $region28: #{tpu_custom_call.1} parent=1 // pred_region
      %232 = dma.done [#allocation4], 128
    $region29: #{tpu_custom_call.1} parent=1 // pred_fallthru
      _
    %233 = vsyncpa [#allocation3], 1
    %234 = vsyncpa [#allocation6], 1
    %235 = vsyncpa [#allocation4], 1

</llo_original>
